<compile_context>
chip_gen: v6e
topology: v6e:2x2x1
jax: 0.10.0
libtpu: 0.0.40
codegen_flags: <defaults>
</compile_context>

<pallas_src>
import functools
import math

import jax
import jax.numpy as jnp
from jax.experimental import pallas as pl
from jax.experimental.pallas import tpu as pltpu

NEG_INF = -1e9  # matches torch masked_fill(-1000000000.0)


# ----------------------------- Pallas kernel ------------------------------- #

def _hier_pool_kernel(h_ref, m_ref, wl_ref, bl_ref, vl_ref,
                      wg_ref, bg_ref, vg_ref, o_ref,
                      m_sc, l_sc, acc_sc, *, num_windows):
    """One grid step: k windows of the sequence for one batch tile.

    h_ref : (bt, k*W, H)      hidden-state slice (direct BlockSpec of [B, S, H])
    m_ref : (1, bt, k, W)     attention mask, pre-grouped per (block, batch, win)
    wl/bl/vl, wg/bg/vg : local / global attention params ([H,A], [1,A], [1,A])
    o_ref : (1, bt, H)        final pooled output (written on last window block)
    m_sc, l_sc : (bt, 1)      online-softmax running max / denom (global stage)
    acc_sc     : (bt, H)      online-softmax running numerator (global stage)
    """
    bt, kW, H = h_ref.shape
    k = m_ref.shape[2]
    W = m_ref.shape[3]
    G = bt * k                       # (batch, window) groups in this block
    wi = pl.program_id(1)            # window-block index (accumulator axis)

    @pl.when(wi == 0)
    def _init():
        m_sc[...] = jnp.full_like(m_sc, -jnp.inf)
        l_sc[...] = jnp.zeros_like(l_sc)
        acc_sc[...] = jnp.zeros_like(acc_sc)

    # ---------------- local stage: pool each of the k windows ---------------- #
    h = h_ref[...]                                           # [bt, kW, H]
    mask = m_ref[...].reshape(G, W)                          # [G, W]

    # projection on the MXU (bf16 inputs -> fast MXU path, f32 accumulate)
    ah = jnp.tanh(
        jnp.dot(h.reshape(G * W, H), wl_ref[...],
                preferred_element_type=jnp.float32)
        + bl_ref[...].astype(jnp.float32))                   # [G*W, A]
    s = jnp.sum(ah.reshape(G, W, -1) * vl_ref[...].astype(jnp.float32)[None],
                axis=-1)                                     # [G, W]
    # masked_fill semantics: fully masked window -> uniform weights (as torch)
    s = jnp.where(mask == 0.0, NEG_INF, s)
    # TODO(synk): [G, W] keeps only W(=window_size) lanes busy for the local
    # softmax; transpose so G sits on lanes if this ever becomes VPU-bound.

    s_max = jnp.max(s, axis=-1, keepdims=True)
    e = jnp.exp(s - s_max)
    w_loc = e / jnp.sum(e, axis=-1, keepdims=True)           # exact, f32
    # nn.Dropout on the attention weights is identity in eval mode.

    # weighted pooling on the VPU (a unit-M batched matmul here would lower to
    # G tiny MXU pushes and dominate the step time)
    hf = h.reshape(G, W, H).astype(jnp.float32)
    win = jnp.sum(w_loc[:, :, None] * hf, axis=1)            # [G, H] f32

    # ------------- global stage: online softmax over window reps ------------- #
    gah = jnp.tanh(
        jnp.dot(win, wg_ref[...].astype(jnp.float32),
                preferred_element_type=jnp.float32)
        + bg_ref[...].astype(jnp.float32))                   # [G, A]
    gs = jnp.sum(gah.reshape(bt, k, -1) * vg_ref[...].astype(jnp.float32)[None],
                 axis=-1)                                    # [bt, k]

    # windows past the true window count only exist because of sequence
    # padding; they don't exist in the torch reference -> exclude them.
    widx = wi * k + jax.lax.broadcasted_iota(jnp.int32, (bt, k), 1)
    gs = jnp.where(widx < num_windows, gs, NEG_INF)

    m_prev = m_sc[...]
    m_new = jnp.maximum(m_prev, jnp.max(gs, axis=-1, keepdims=True))
    alpha = jnp.exp(m_prev - m_new)
    p = jnp.exp(gs - m_new)                                  # [bt, k]
    l_sc[...] = alpha * l_sc[...] + jnp.sum(p, axis=-1, keepdims=True)
    contrib = jnp.sum(p[:, :, None] * win.reshape(bt, k, H), axis=1)   # VPU
    acc_sc[...] = alpha * acc_sc[...] + contrib
    m_sc[...] = m_new

    @pl.when(wi == pl.num_programs(1) - 1)
    def _finalize():
        o_ref[...] = (acc_sc[...] / l_sc[...]).reshape(o_ref.shape).astype(o_ref.dtype)


# ------------------------------ JAX wrapper -------------------------------- #

def _pick_batch_tile(B):
    """Largest divisor of B (capped at 8) that leaves >= 2 steps on the
    'parallel' batch grid axis, so both v7x TensorCores get work."""
    best = 1
    for d in range(1, min(8, B // 2) + 1):
        if B % d == 0:
            best = d
    return best if B > 1 else B


def _vmem_limit_bytes():
    try:
        cap = pltpu.get_tpu_info().vmem_capacity_bytes
    except Exception:
        cap = 64 * 1024 * 1024          # conservative: v7x per-TC VMEM
    return int(cap * 3 // 4)            # leave headroom for the compiler


def hierarchical_attention_pooling(hidden_states, attention_mask, params,
                                   window_size, *, windows_per_block=None):
    B, S, H = hidden_states.shape
    A = params["w_local"].shape[1]
    W = window_size
    NW = -(-S // W)                              # true #windows (matches torch)
    dtype = hidden_states.dtype
    itemsize = dtype.itemsize

    if attention_mask is None:
        attention_mask = jnp.ones((B, S), jnp.float32)
    else:
        attention_mask = attention_mask.astype(jnp.float32)

    bt = _pick_batch_tile(B)
    vmem_limit = _vmem_limit_bytes()

    # ~6-16 MiB of hidden state per grid step amortizes the ~0.35us per-step
    # pipeline overhead; bigger target when the part has more VMEM (v5e/v6e).
    target_block_bytes = (16 if vmem_limit >= 80 * 1024 * 1024 else 8) * 1024 * 1024
    # per-window VMEM cost: double-buffered input block + f32 temporaries
    per_win = bt * W * (2 * H * itemsize + 4 * A + (4 * H if itemsize < 4 else 0))
    k_align = 8 // math.gcd(W, 8)                # k*W must be sublane-aligned
    k_vmem_cap = max(k_align,
                     ((vmem_limit - 4 * 1024 * 1024) // max(1, per_win))
                     // k_align * k_align)

    bytes_per_window = bt * W * H * itemsize
    if windows_per_block is None:
        k = max(1, target_block_bytes // max(1, bytes_per_window))
    else:
        k = max(1, int(windows_per_block))
    k = -(-k // k_align) * k_align                     # round up to alignment
    k = min(k, -(-NW // k_align) * k_align)            # no more than needed
    k = min(k, k_vmem_cap)
    k = max(k, k_align)

    # Prefer a near-target k that divides NW exactly -> skip the jnp.pad
    # (a full extra HBM read+write pass over [B,S,H] on this mem-bound kernel).
    if windows_per_block is None and S % W == 0 and NW % k != 0:
        divs = [d for d in range(k_align, NW + 1)
                if NW % d == 0 and d % k_align == 0 and d <= k]
        good = [d for d in divs if 4 * d >= k]
        if good:
            k = max(good)

    kW = k * W
    num_blocks = -(-NW // k)
    S_pad = num_blocks * kW

    if S_pad != S:
        # TODO(synk): the pad path still costs an extra HBM pass; align S to
        # k*W upstream (or add a sanitized ragged last block) to avoid it.
        hidden_states = jnp.pad(hidden_states, ((0, 0), (0, S_pad - S), (0, 0)))
        attention_mask = jnp.pad(attention_mask, ((0, 0), (0, S_pad - S)))

    # tiny mask pre-grouped as [num_blocks, B, k, W]; the big hidden_states
    # tensor stays in [B, S, H] and is sliced directly by its BlockSpec.
    m_grp = attention_mask.reshape(B, num_blocks, k, W).transpose(1, 0, 2, 3)

    kernel = functools.partial(_hier_pool_kernel, num_windows=NW)
    grid = (B // bt, num_blocks)

    # TODO(synk): weight BlockSpecs could use pipeline_mode=pl.Buffered(1)
    # (constant index_map) to save VMEM headroom if H*A grows large.
    out = pl.pallas_call(
        kernel,
        out_shape=jax.ShapeDtypeStruct((B // bt, bt, H), dtype),
        grid=grid,
        in_specs=[
            pl.BlockSpec((bt, kW, H), lambda bi, wi: (bi, wi, 0)),
            pl.BlockSpec((1, bt, k, W), lambda bi, wi: (wi, bi, 0, 0)),
            pl.BlockSpec((H, A), lambda bi, wi: (0, 0)),
            pl.BlockSpec((1, A), lambda bi, wi: (0, 0)),
            pl.BlockSpec((1, A), lambda bi, wi: (0, 0)),
            pl.BlockSpec((H, A), lambda bi, wi: (0, 0)),
            pl.BlockSpec((1, A), lambda bi, wi: (0, 0)),
            pl.BlockSpec((1, A), lambda bi, wi: (0, 0)),
        ],
        out_specs=pl.BlockSpec((1, bt, H), lambda bi, wi: (bi, 0, 0)),
        scratch_shapes=[
            pltpu.VMEM((bt, 1), jnp.float32),   # running max  (global softmax)
            pltpu.VMEM((bt, 1), jnp.float32),   # running denom
            pltpu.VMEM((bt, H), jnp.float32),   # running numerator
        ],
        compiler_params=pltpu.CompilerParams(
            dimension_semantics=("parallel", "arbitrary"),
            vmem_limit_bytes=vmem_limit),
    )(hidden_states, m_grp,
      params["w_local"], params["b_local"], params["v_local"],
      params["w_global"], params["b_global"], params["v_global"])
    return out.reshape(B, H)


# ---------------------- deterministic parameter init ----------------------- #

def init_params(key, hidden_dim, attention_dim):
    H, A = hidden_dim, attention_dim
    k = jax.random.split(key, 4)
    bound = math.sqrt(6.0 / (H + A))  # xavier_uniform for Linear(H -> A)
    return {
        # stored as [H, A] (transpose of PyTorch's [A, H]) so kernel does x @ W
        "w_local": jax.random.uniform(k[0], (H, A), jnp.float32, -bound, bound),
        "b_local": jnp.zeros((1, A), jnp.float32),
        "v_local": 0.1 * jax.random.normal(k[1], (1, A), jnp.float32),
        "w_global": jax.random.uniform(k[2], (H, A), jnp.float32, -bound, bound),
        "b_global": jnp.zeros((1, A), jnp.float32),
        "v_global": 0.1 * jax.random.normal(k[3], (1, A), jnp.float32),
    }


# ------------------------- pure-JAX reference check ------------------------ #

def _attention_pool_ref(h, mask, w, b, v):
    ah = jnp.tanh(h @ w + b[0])
    scores = jnp.einsum('bsa,a->bs', ah, v[0])
    if mask is not None:
        scores = jnp.where(mask == 0, NEG_INF, scores)
    weights = jax.nn.softmax(scores, axis=1)
    return jnp.sum(h * weights[..., None], axis=1)


def hierarchical_ref(h, mask, params, window_size):
    B, S, H = h.shape
    W = window_size
    NW = -(-S // W)
    reps = []
    for i in range(NW):
        s0, e0 = i * W, min((i + 1) * W, S)
        wm = None if mask is None else mask[:, s0:e0]
        reps.append(_attention_pool_ref(h[:, s0:e0], wm, params["w_local"],
                                        params["b_local"], params["v_local"]))
    stacked = jnp.stack(reps, axis=1)
    return _attention_pool_ref(stacked, None, params["w_global"],
                               params["b_global"], params["v_global"])


# ----------------------------------- main ----------------------------------- #

if __name__ == "__main__":
    B, H, A, W = 2, 128, 128, 8

    key = jax.random.PRNGKey(0)
    k_data, k_params = jax.random.split(key)
    params = init_params(k_params, H, A)

    def run_case(S, windows_per_block, tag, dtype=jnp.float32, tol=2e-3):
        kx = jax.random.fold_in(k_data, S)
        x = jax.random.normal(kx, (B, S, H), jnp.float32)
        mask = jnp.ones((B, S), jnp.float32).at[1, S - 3:].set(0.0)  # pad tail
        x_in = x.astype(dtype)
        p_in = jax.tree_util.tree_map(lambda p: p.astype(dtype), params)
        out = hierarchical_attention_pooling(
            x_in, mask, p_in, W, windows_per_block=windows_per_block)
        out = jax.block_until_ready(out)
        ref = hierarchical_ref(
            x_in.astype(jnp.float32), mask,
            jax.tree_util.tree_map(lambda p: p.astype(jnp.float32), p_in), W)
        assert out.shape == (B, H), f"{tag}: bad shape {out.shape}"
        err = float(jnp.max(jnp.abs(out.astype(jnp.float32) - ref)))
        assert err < tol, f"{tag}: max abs diff {err}"

    run_case(S=128, windows_per_block=4, tag="multi-block")        # 4 accumulation steps
    run_case(S=120, windows_per_block=4, tag="pad+phantom-window") # padded phantom window
    run_case(S=128, windows_per_block=None, tag="auto-block")      # divisor k, no pad
    run_case(S=124, windows_per_block=None, tag="ragged-tail")     # ragged last window
    run_case(S=128, windows_per_block=4, tag="bf16",
             dtype=jnp.bfloat16, tol=5e-2)                         # bf16 HBM path

    print("KERNEL_OK")
</pallas_src>

<mosaic_0001>
module attributes {stable_mosaic.version = 11 : i64} {
  func.func @_hier_pool_kernel(%arg0: i32, %arg1: i32, %arg2: memref<1x32x128xf32, #tpu.memory_space<vmem>>, %arg3: memref<1x1x4x8xf32, #tpu.memory_space<vmem>>, %arg4: memref<128x128xf32, #tpu.memory_space<vmem>>, %arg5: memref<1x128xf32, #tpu.memory_space<vmem>>, %arg6: memref<1x128xf32, #tpu.memory_space<vmem>>, %arg7: memref<128x128xf32, #tpu.memory_space<vmem>>, %arg8: memref<1x128xf32, #tpu.memory_space<vmem>>, %arg9: memref<1x128xf32, #tpu.memory_space<vmem>>, %arg10: memref<1x1x128xf32, #tpu.memory_space<vmem>>, %arg11: memref<1x1xf32, #tpu.memory_space<vmem>>, %arg12: memref<1x1xf32, #tpu.memory_space<vmem>>, %arg13: memref<1x128xf32, #tpu.memory_space<vmem>>) attributes {dimension_semantics = [#tpu.dimension_semantics<parallel>, #tpu.dimension_semantics<arbitrary>], iteration_bounds = array<i64: 2, 4>, scalar_prefetch = 0 : i64, scratch_operands = 3 : i64, tpu.core_type = #tpu.core_type<tc>, window_params = [{transform_indices = @transform_0, window_bounds = array<i64: 1, 32, 128>}, {transform_indices = @transform_1, window_bounds = array<i64: 1, 1, 4, 8>}, {pipeline_mode = #tpu.pipeline_mode<synchronous>, transform_indices = @transform_2, window_bounds = array<i64: 128, 128>}, {pipeline_mode = #tpu.pipeline_mode<synchronous>, transform_indices = @transform_3, window_bounds = array<i64: 1, 128>}, {pipeline_mode = #tpu.pipeline_mode<synchronous>, transform_indices = @transform_4, window_bounds = array<i64: 1, 128>}, {pipeline_mode = #tpu.pipeline_mode<synchronous>, transform_indices = @transform_5, window_bounds = array<i64: 128, 128>}, {pipeline_mode = #tpu.pipeline_mode<synchronous>, transform_indices = @transform_6, window_bounds = array<i64: 1, 128>}, {pipeline_mode = #tpu.pipeline_mode<synchronous>, transform_indices = @transform_7, window_bounds = array<i64: 1, 128>}, {transform_indices = @transform_8, window_bounds = array<i64: 1, 1, 128>}]} {
    %c0_i32 = arith.constant 0 : i32
    %0 = arith.cmpi eq, %arg1, %c0_i32 : i32
    %1 = arith.extui %0 : i1 to i32
    %c0_i32_0 = arith.constant 0 : i32
    %2 = arith.cmpi ne, %1, %c0_i32_0 : i32
    scf.if %2 {
      %cst_44 = arith.constant 0xFF800000 : f32
      %86 = vector.broadcast %cst_44 : f32 to vector<1x1xf32>
      %c0_45 = arith.constant 0 : index
      %c0_46 = arith.constant 0 : index
      %87 = vector.load %arg11[%c0_45, %c0_46] : memref<1x1xf32, #tpu.memory_space<vmem>>, vector<1x1xf32>
      tpu.vector_store %arg11[%c0_45, %c0_46], %86 {strides = array<i32>} : memref<1x1xf32, #tpu.memory_space<vmem>>, vector<1x1xf32>,
      %cst_47 = arith.constant 0.000000e+00 : f32
      %88 = vector.broadcast %cst_47 : f32 to vector<1x1xf32>
      %c0_48 = arith.constant 0 : index
      %c0_49 = arith.constant 0 : index
      %89 = vector.load %arg12[%c0_48, %c0_49] : memref<1x1xf32, #tpu.memory_space<vmem>>, vector<1x1xf32>
      tpu.vector_store %arg12[%c0_48, %c0_49], %88 {strides = array<i32>} : memref<1x1xf32, #tpu.memory_space<vmem>>, vector<1x1xf32>,
      %cst_50 = arith.constant 0.000000e+00 : f32
      %90 = vector.broadcast %cst_50 : f32 to vector<1x128xf32>
      %c0_51 = arith.constant 0 : index
      %c0_52 = arith.constant 0 : index
      %91 = vector.load %arg13[%c0_51, %c0_52] : memref<1x128xf32, #tpu.memory_space<vmem>>, vector<1x128xf32>
      tpu.vector_store %arg13[%c0_51, %c0_52], %90 {strides = array<i32>} : memref<1x128xf32, #tpu.memory_space<vmem>>, vector<1x128xf32>,
    } else {
    }
    %c0 = arith.constant 0 : index
    %c0_1 = arith.constant 0 : index
    %c0_2 = arith.constant 0 : index
    %3 = vector.load %arg2[%c0, %c0_1, %c0_2] : memref<1x32x128xf32, #tpu.memory_space<vmem>>, vector<1x32x128xf32>
    %c0_3 = arith.constant 0 : index
    %c0_4 = arith.constant 0 : index
    %c0_5 = arith.constant 0 : index
    %c0_6 = arith.constant 0 : index
    %4 = vector.load %arg3[%c0_3, %c0_4, %c0_5, %c0_6] : memref<1x1x4x8xf32, #tpu.memory_space<vmem>>, vector<1x1x4x8xf32>
    %5 = vector.shape_cast %4 : vector<1x1x4x8xf32> to vector<4x8xf32>
    %6 = vector.shape_cast %3 : vector<1x32x128xf32> to vector<32x128xf32>
    %c0_7 = arith.constant 0 : index
    %c0_8 = arith.constant 0 : index
    %7 = vector.load %arg4[%c0_7, %c0_8] : memref<128x128xf32, #tpu.memory_space<vmem>>, vector<128x128xf32>
    %cst = arith.constant dense<0.000000e+00> : vector<32x128xf32>
    %8 = tpu.matmul %6, %7, %cst {dimension_numbers = #tpu.dot_dimension_numbers<[1], [0], [0], [1], [0, 0, 1, 1], [], []>} : vector<32x128xf32>, vector<128x128xf32>, vector<32x128xf32> -> vector<32x128xf32>
    %c0_9 = arith.constant 0 : index
    %c0_10 = arith.constant 0 : index
    %9 = vector.load %arg5[%c0_9, %c0_10] : memref<1x128xf32, #tpu.memory_space<vmem>>, vector<1x128xf32>
    %10 = vector.broadcast %9 : vector<1x128xf32> to vector<32x128xf32>
    %11 = arith.addf %8, %10 : vector<32x128xf32>
    %12 = math.tanh %11 : vector<32x128xf32>
    %13 = vector.shape_cast %12 : vector<32x128xf32> to vector<4x8x128xf32>
    %c0_11 = arith.constant 0 : index
    %c0_12 = arith.constant 0 : index
    %14 = vector.load %arg6[%c0_11, %c0_12] : memref<1x128xf32, #tpu.memory_space<vmem>>, vector<1x128xf32>
    %15 = vector.shape_cast %14 : vector<1x128xf32> to vector<1x1x128xf32>
    %16 = vector.broadcast %15 : vector<1x1x128xf32> to vector<4x8x128xf32>
    %17 = arith.mulf %13, %16 : vector<4x8x128xf32>
    %cst_13 = arith.constant dense<0.000000e+00> : vector<4x8xf32>
    %18 = vector.multi_reduction <add>, %17, %cst_13 [2] : vector<4x8x128xf32> to vector<4x8xf32>
    %cst_14 = arith.constant 0.000000e+00 : f32
    %19 = vector.broadcast %cst_14 : f32 to vector<4x8xf32>
    %20 = arith.cmpf oeq, %5, %19 : vector<4x8xf32>
    %cst_15 = arith.constant -1.000000e+09 : f32
    %21 = vector.broadcast %cst_15 : f32 to vector<4x8xf32>
    %22 = arith.select %20, %21, %18 : vector<4x8xi1>, vector<4x8xf32>
    %cst_16 = arith.constant dense<0xFF800000> : vector<4xf32>
    %23 = vector.multi_reduction <maximumf>, %22, %cst_16 [1] : vector<4x8xf32> to vector<4xf32>
    %24 = vector.shape_cast %23 : vector<4xf32> to vector<4x1xf32>
    %25 = vector.broadcast %24 : vector<4x1xf32> to vector<4x8xf32>
    %26 = arith.subf %22, %25 : vector<4x8xf32>
    %27 = math.exp %26 : vector<4x8xf32>
    %cst_17 = arith.constant dense<0.000000e+00> : vector<4xf32>
    %28 = vector.multi_reduction <add>, %27, %cst_17 [1] : vector<4x8xf32> to vector<4xf32>
    %29 = vector.shape_cast %28 : vector<4xf32> to vector<4x1xf32>
    %30 = vector.broadcast %29 : vector<4x1xf32> to vector<4x8xf32>
    %31 = arith.divf %27, %30 : vector<4x8xf32>
    %32 = vector.shape_cast %3 : vector<1x32x128xf32> to vector<4x8x128xf32>
    %33 = vector.shape_cast %31 : vector<4x8xf32> to vector<4x8x1xf32>
    %34 = vector.broadcast %33 : vector<4x8x1xf32> to vector<4x8x128xf32>
    %35 = arith.mulf %34, %32 : vector<4x8x128xf32>
    %cst_18 = arith.constant dense<0.000000e+00> : vector<4x128xf32>
    %36 = vector.multi_reduction <add>, %35, %cst_18 [1] : vector<4x8x128xf32> to vector<4x128xf32>
    %c0_19 = arith.constant 0 : index
    %c0_20 = arith.constant 0 : index
    %37 = vector.load %arg7[%c0_19, %c0_20] : memref<128x128xf32, #tpu.memory_space<vmem>>, vector<128x128xf32>
    %cst_21 = arith.constant dense<0.000000e+00> : vector<4x128xf32>
    %38 = tpu.matmul %36, %37, %cst_21 {dimension_numbers = #tpu.dot_dimension_numbers<[1], [0], [0], [1], [0, 0, 1, 1], [], []>} : vector<4x128xf32>, vector<128x128xf32>, vector<4x128xf32> -> vector<4x128xf32>
    %c0_22 = arith.constant 0 : index
    %c0_23 = arith.constant 0 : index
    %39 = vector.load %arg8[%c0_22, %c0_23] : memref<1x128xf32, #tpu.memory_space<vmem>>, vector<1x128xf32>
    %40 = vector.broadcast %39 : vector<1x128xf32> to vector<4x128xf32>
    %41 = arith.addf %38, %40 : vector<4x128xf32>
    %42 = math.tanh %41 : vector<4x128xf32>
    %43 = vector.shape_cast %42 : vector<4x128xf32> to vector<1x4x128xf32>
    %c0_24 = arith.constant 0 : index
    %c0_25 = arith.constant 0 : index
    %44 = vector.load %arg9[%c0_24, %c0_25] : memref<1x128xf32, #tpu.memory_space<vmem>>, vector<1x128xf32>
    %45 = vector.shape_cast %44 : vector<1x128xf32> to vector<1x1x128xf32>
    %46 = vector.broadcast %45 : vector<1x1x128xf32> to vector<1x4x128xf32>
    %47 = arith.mulf %43, %46 : vector<1x4x128xf32>
    %cst_26 = arith.constant dense<0.000000e+00> : vector<1x4xf32>
    %48 = vector.multi_reduction <add>, %47, %cst_26 [2] : vector<1x4x128xf32> to vector<1x4xf32>
    %c4_i32 = arith.constant 4 : i32
    %49 = arith.muli %arg1, %c4_i32 : i32
    %50 = tpu.iota {dimensions = array<i32: 1>} : vector<1x4xi32>
    %51 = vector.broadcast %49 : i32 to vector<1x4xi32>
    %52 = arith.addi %51, %50 : vector<1x4xi32>
    %c16_i32 = arith.constant 16 : i32
    %53 = vector.broadcast %c16_i32 : i32 to vector<1x4xi32>
    %54 = arith.cmpi slt, %52, %53 : vector<1x4xi32>
    %cst_27 = arith.constant -1.000000e+09 : f32
    %55 = vector.broadcast %cst_27 : f32 to vector<1x4xf32>
    %56 = arith.select %54, %48, %55 : vector<1x4xi1>, vector<1x4xf32>
    %c0_28 = arith.constant 0 : index
    %c0_29 = arith.constant 0 : index
    %57 = vector.load %arg11[%c0_28, %c0_29] : memref<1x1xf32, #tpu.memory_space<vmem>>, vector<1x1xf32>
    %cst_30 = arith.constant dense<0xFF800000> : vector<1xf32>
    %58 = vector.multi_reduction <maximumf>, %56, %cst_30 [1] : vector<1x4xf32> to vector<1xf32>
    %59 = vector.shape_cast %58 : vector<1xf32> to vector<1x1xf32>
    %60 = arith.maximumf %57, %59 : vector<1x1xf32>
    %61 = arith.subf %57, %60 : vector<1x1xf32>
    %62 = math.exp %61 : vector<1x1xf32>
    %63 = vector.broadcast %60 : vector<1x1xf32> to vector<1x4xf32>
    %64 = arith.subf %56, %63 : vector<1x4xf32>
    %65 = math.exp %64 : vector<1x4xf32>
    %c0_31 = arith.constant 0 : index
    %c0_32 = arith.constant 0 : index
    %66 = vector.load %arg12[%c0_31, %c0_32] : memref<1x1xf32, #tpu.memory_space<vmem>>, vector<1x1xf32>
    %67 = arith.mulf %62, %66 : vector<1x1xf32>
    %cst_33 = arith.constant dense<0.000000e+00> : vector<1xf32>
    %68 = vector.multi_reduction <add>, %65, %cst_33 [1] : vector<1x4xf32> to vector<1xf32>
    %69 = vector.shape_cast %68 : vector<1xf32> to vector<1x1xf32>
    %70 = arith.addf %67, %69 : vector<1x1xf32>
    %c0_34 = arith.constant 0 : index
    %c0_35 = arith.constant 0 : index
    %71 = vector.load %arg12[%c0_34, %c0_35] : memref<1x1xf32, #tpu.memory_space<vmem>>, vector<1x1xf32>
    tpu.vector_store %arg12[%c0_34, %c0_35], %70 {strides = array<i32>} : memref<1x1xf32, #tpu.memory_space<vmem>>, vector<1x1xf32>,
    %72 = vector.shape_cast %65 : vector<1x4xf32> to vector<1x4x1xf32>
    %73 = vector.shape_cast %36 : vector<4x128xf32> to vector<1x4x128xf32>
    %74 = vector.broadcast %72 : vector<1x4x1xf32> to vector<1x4x128xf32>
    %75 = arith.mulf %74, %73 : vector<1x4x128xf32>
    %cst_36 = arith.constant dense<0.000000e+00> : vector<1x128xf32>
    %76 = vector.multi_reduction <add>, %75, %cst_36 [1] : vector<1x4x128xf32> to vector<1x128xf32>
    %c0_37 = arith.constant 0 : index
    %c0_38 = arith.constant 0 : index
    %77 = vector.load %arg13[%c0_37, %c0_38] : memref<1x128xf32, #tpu.memory_space<vmem>>, vector<1x128xf32>
    %78 = vector.broadcast %62 : vector<1x1xf32> to vector<1x128xf32>
    %79 = arith.mulf %78, %77 : vector<1x128xf32>
    %80 = arith.addf %79, %76 : vector<1x128xf32>
    %c0_39 = arith.constant 0 : index
    %c0_40 = arith.constant 0 : index
    %81 = vector.load %arg13[%c0_39, %c0_40] : memref<1x128xf32, #tpu.memory_space<vmem>>, vector<1x128xf32>
    tpu.vector_store %arg13[%c0_39, %c0_40], %80 {strides = array<i32>} : memref<1x128xf32, #tpu.memory_space<vmem>>, vector<1x128xf32>,
    %c0_41 = arith.constant 0 : index
    %c0_42 = arith.constant 0 : index
    %82 = vector.load %arg11[%c0_41, %c0_42] : memref<1x1xf32, #tpu.memory_space<vmem>>, vector<1x1xf32>
    tpu.vector_store %arg11[%c0_41, %c0_42], %60 {strides = array<i32>} : memref<1x1xf32, #tpu.memory_space<vmem>>, vector<1x1xf32>,
    %c3_i32 = arith.constant 3 : i32
    %83 = arith.cmpi eq, %arg1, %c3_i32 : i32
    %84 = arith.extui %83 : i1 to i32
    %c0_i32_43 = arith.constant 0 : i32
    %85 = arith.cmpi ne, %84, %c0_i32_43 : i32
    scf.if %85 {
      %c0_44 = arith.constant 0 : index
      %c0_45 = arith.constant 0 : index
      %86 = vector.load %arg13[%c0_44, %c0_45] : memref<1x128xf32, #tpu.memory_space<vmem>>, vector<1x128xf32>
      %c0_46 = arith.constant 0 : index
      %c0_47 = arith.constant 0 : index
      %87 = vector.load %arg12[%c0_46, %c0_47] : memref<1x1xf32, #tpu.memory_space<vmem>>, vector<1x1xf32>
      %88 = vector.broadcast %87 : vector<1x1xf32> to vector<1x128xf32>
      %89 = arith.divf %86, %88 : vector<1x128xf32>
      %90 = vector.shape_cast %89 : vector<1x128xf32> to vector<1x1x128xf32>
      %c0_48 = arith.constant 0 : index
      %c0_49 = arith.constant 0 : index
      %c0_50 = arith.constant 0 : index
      %91 = vector.load %arg10[%c0_48, %c0_49, %c0_50] : memref<1x1x128xf32, #tpu.memory_space<vmem>>, vector<1x1x128xf32>
      tpu.vector_store %arg10[%c0_48, %c0_49, %c0_50], %90 {strides = array<i32>} : memref<1x1x128xf32, #tpu.memory_space<vmem>>, vector<1x1x128xf32>,
    } else {
    }
    return
  }
  func.func @transform_0(%arg0: i32, %arg1: i32) -> (i32, i32, i32) {
    %c0_i32 = arith.constant 0 : i32
    %c0_i32_0 = arith.constant 0 : i32
    return %arg0, %arg1, %c0_i32 : i32, i32, i32
  }
  func.func @transform_1(%arg0: i32, %arg1: i32) -> (i32, i32, i32, i32) {
    %c0_i32 = arith.constant 0 : i32
    %c0_i32_0 = arith.constant 0 : i32
    %c0_i32_1 = arith.constant 0 : i32
    return %arg1, %arg0, %c0_i32, %c0_i32_0 : i32, i32, i32, i32
  }
  func.func @transform_2(%arg0: i32, %arg1: i32) -> (i32, i32) {
    %c0_i32 = arith.constant 0 : i32
    %c0_i32_0 = arith.constant 0 : i32
    %c0_i32_1 = arith.constant 0 : i32
    return %c0_i32, %c0_i32_0 : i32, i32
  }
  func.func @transform_3(%arg0: i32, %arg1: i32) -> (i32, i32) {
    %c0_i32 = arith.constant 0 : i32
    %c0_i32_0 = arith.constant 0 : i32
    %c0_i32_1 = arith.constant 0 : i32
    return %c0_i32, %c0_i32_0 : i32, i32
  }
  func.func @transform_4(%arg0: i32, %arg1: i32) -> (i32, i32) {
    %c0_i32 = arith.constant 0 : i32
    %c0_i32_0 = arith.constant 0 : i32
    %c0_i32_1 = arith.constant 0 : i32
    return %c0_i32, %c0_i32_0 : i32, i32
  }
  func.func @transform_5(%arg0: i32, %arg1: i32) -> (i32, i32) {
    %c0_i32 = arith.constant 0 : i32
    %c0_i32_0 = arith.constant 0 : i32
    %c0_i32_1 = arith.constant 0 : i32
    return %c0_i32, %c0_i32_0 : i32, i32
  }
  func.func @transform_6(%arg0: i32, %arg1: i32) -> (i32, i32) {
    %c0_i32 = arith.constant 0 : i32
    %c0_i32_0 = arith.constant 0 : i32
    %c0_i32_1 = arith.constant 0 : i32
    return %c0_i32, %c0_i32_0 : i32, i32
  }
  func.func @transform_7(%arg0: i32, %arg1: i32) -> (i32, i32) {
    %c0_i32 = arith.constant 0 : i32
    %c0_i32_0 = arith.constant 0 : i32
    %c0_i32_1 = arith.constant 0 : i32
    return %c0_i32, %c0_i32_0 : i32, i32
  }
  func.func @transform_8(%arg0: i32, %arg1: i32) -> (i32, i32, i32) {
    %c0_i32 = arith.constant 0 : i32
    %c0_i32_0 = arith.constant 0 : i32
    %c0_i32_1 = arith.constant 0 : i32
    return %arg0, %c0_i32, %c0_i32_0 : i32, i32, i32
  }
}

</mosaic_0001>

<llo_original>
// kernel: tpu_custom_call.1
$region0: #{tpu_custom_call.1}
  #allocation0 [shape = 'u32[]', space=smem, size = 0x4, offset = 0x4, fixed_abs, tag = 'smem constant byte address 0x4 - core index']
  #allocation1 [shape = 'u32[144,128]{1,0:T(1,128)}', space=vmem, size = 0x12000, scoped, tag = 'internal scratch']
  #allocation2 [shape = 'f32[1,1]{1,0:T(1,128)}', space=vmem, size = 0x200, scoped, tag = 'scratch operand']
  #allocation3 [shape = 'f32[1,1]{1,0:T(1,128)}', space=vmem, size = 0x200, scoped, tag = 'scratch operand']
  #allocation4 [shape = 'f32[1,128]{1,0:T(1,128)}', space=vmem, size = 0x200, scoped, tag = 'scratch operand']
  %s0 = inlined_call_operand.hbm [shape: f32[2,128,128], index: 0, kind: input, shape index: {}]
  %s1 = inlined_call_operand.hbm [shape: f32[4,2,4,8], index: 1, kind: input, shape index: {}]
  %s2 = inlined_call_operand.hbm [shape: f32[128,128], index: 2, kind: input, shape index: {}]
  %s3 = inlined_call_operand.vmem [shape: f32[1,128], index: 3, kind: input, shape index: {}]
  %s4 = inlined_call_operand.vmem [shape: f32[1,128], index: 4, kind: input, shape index: {}]
  %s5 = inlined_call_operand.hbm [shape: f32[128,128], index: 5, kind: input, shape index: {}]
  %s6 = inlined_call_operand.vmem [shape: f32[1,128], index: 6, kind: input, shape index: {}]
  %s7 = inlined_call_operand.vmem [shape: f32[1,128], index: 7, kind: input, shape index: {}]
  %s8 = inlined_call_operand.hbm [shape: f32[2,1,128], index: 8, kind: output, shape index: {}]
  %s9 = sld [smem:[#allocation0]]
  $region89: #{tpu_custom_call.1} parent=0
    _
  %s11 = ssub.s32 1, %s9
  %s12 = scalar_select 0, %s11, %s9
  $region1: #{tpu_custom_call.1} parent=0
    #allocation5 [shape = 'u8[32768]{0}', space=vmem, size = 0x8000, scoped, tag = 'input window, operand 0']
    #allocation6 [shape = 's32[2]{0}', space=sflag, size = 0x8, scoped, tag = 'scoped memory for tpu_custom_call.1']
    #allocation7 [shape = 's32[2]{0}', space=sflag, size = 0x8, scoped, tag = 'scoped memory for tpu_custom_call.1']
    #allocation8 [shape = 'u8[4096]{0}', space=vmem, size = 0x1000, scoped, tag = 'input window, operand 1']
    #allocation9 [shape = 's32[2]{0}', space=sflag, size = 0x8, scoped, tag = 'scoped memory for tpu_custom_call.1']
    #allocation10 [shape = 'u8[65536]{0}', space=vmem, size = 0x10000, scoped, tag = 'input window, operand 2, single buffered']
    #allocation11 [shape = 'u8[65536]{0}', space=vmem, size = 0x10000, scoped, tag = 'input window, operand 5, single buffered']
    #allocation12 [shape = 's32[1]{0}', space=sflag, size = 0x4, scoped, tag = 'scoped memory for tpu_custom_call.1']
    #allocation13 [shape = 'u8[1024]{0}', space=vmem, size = 0x400, scoped, tag = 'output window, operand 0']
    %13 = vsyncpa [#allocation6], 0
    %s14 = scalar_lea.sflag [#allocation6], 1
    %15 = vsyncpa %s14, 0
    %16 = vsyncpa [#allocation9], 0
    %s17 = scalar_lea.sflag [#allocation9], 1
    %18 = vsyncpa %s17, 0
    %19 = vsyncpa [#allocation12], 0
    %20 = vsyncpa [#allocation7], 0
    %s21 = scalar_lea.sflag [#allocation7], 1
    %22 = vsyncpa %s21, 0
    loop: start=0, step=1, limit=10
    $region2: #{tpu_custom_call.1} parent=1 // loop_pre_header
      _
    $region3: #{tpu_custom_call.1} parent=1 // loop_header
      %s24 = sphi 0, %s28
      %p25 = scmp.ge.s32.totalorder %s24, 10
      %s31 = sphi 0, %s43
      %s32 = sphi 0, %s39
      %s33 = sphi 0, %s31
      %s34 = sphi 0, %s32
      %s35 = sphi 0, %s33
      %s36 = sphi 0, %s34
      %s48 = sphi 0, %s50
      %s51 = sphi 0, %s48
      %s52 = sphi 0, %s51
      %s68 = sphi 0, %s52
      %s76 = sphi 0, %s78
      %s79 = sphi 0, %s76
      %s80 = sphi 0, %s79
      %s96 = sphi 0, %s80
      %s100 = sphi 0, %s100
      %s102 = sphi 0, %s100
      %s103 = sphi 0, %s102
      %s117 = sphi 0, %s103
      %s121 = sphi 0, %s121
      %s123 = sphi 0, %s121
      %s124 = sphi 0, %s123
      %s138 = sphi 0, %s124
      %s142 = sphi 0, %s142
      %s144 = sphi 0, %s142
      %s145 = sphi 0, %s144
      %s159 = sphi 0, %s145
      %s163 = sphi 0, %s163
      %s165 = sphi 0, %s163
      %s166 = sphi 0, %s165
      %s180 = sphi 0, %s166
      %s184 = sphi 0, %s184
      %s186 = sphi 0, %s184
      %s187 = sphi 0, %s186
      %s201 = sphi 0, %s187
      %s205 = sphi 0, %s205
      %s207 = sphi 0, %s205
      %s208 = sphi 0, %s207
      %s222 = sphi 0, %s208
      %s228 = sphi 0, %s230
      %s231 = sphi 0, %s228
      %s232 = sphi 0, %s231
      %s248 = sphi 0, %s232
    $region4: #{tpu_custom_call.1} parent=1 // loop_header_branch
      %27 = sbr.rel (%p25) target = $region8
    $region5: #{tpu_custom_call.1} parent=1 // loop_body
      %s29 = ssub.s32 %s24, 1
      %s30 = ssub.s32 %s24, 2
      %s37 = sadd.s32 1, %s32
      %p38 = scmp.ge.s32.totalorder %s37, 4
      %s39 = scalar_select %p38, 0, %s37
      %s40 = sadd.s32 1, %s31
      %s41 = scalar_select %p38, %s40, %s31
      %p42 = scmp.ge.s32.totalorder %s41, 2
      %s43 = scalar_select %p42, 0, %s41
      %s44 = ssub.s32 %s31, %s43
      %s45 = ssub.s32 %s32, %s39
      %s46 = sor.u32 %s44, %s45
      %p47 = scmp.eq.s32.totalorder %s46, 0
      %s49 = sadd.s32 %s48, 1
      %s50 = scalar_select %p47, %s48, %s49
      %p53 = pneg %p47
      %p54 = scmp.eq.s32.totalorder %s24, 7
      %p55 = por %p53, %p54
      %p56 = scmp.ne.s32.totalorder %s48, %s51
      %p57 = scmp.eq.s32.totalorder %s24, 0
      %p58 = por %p56, %p57
      %p59 = scmp.ne.s32.totalorder %s48, %s51
      %p60 = scmp.eq.s32.totalorder %s29, 7
      %p61 = por %p59, %p60
      %p62 = scmp.ne.s32.totalorder %s51, %s52
      %p63 = scmp.eq.s32.totalorder %s29, 0
      %p64 = por %p62, %p63
      %p65 = scmp.ne.s32.totalorder %s51, %s52
      %p66 = scmp.eq.s32.totalorder %s30, 7
      %p67 = por %p65, %p66
      %p69 = scmp.ne.s32.totalorder %s52, %s68
      %p70 = scmp.eq.s32.totalorder %s30, 0
      %p71 = por %p69, %p70
      %s72 = ssub.s32 %s32, %s39
      %s73 = ssub.s32 %s31, %s43
      %s74 = sor.u32 %s72, %s73
      %p75 = scmp.eq.s32.totalorder %s74, 0
      %s77 = sadd.s32 %s76, 1
      %s78 = scalar_select %p75, %s76, %s77
      %p81 = pneg %p75
      %p82 = scmp.eq.s32.totalorder %s24, 7
      %p83 = por %p81, %p82
      %p84 = scmp.ne.s32.totalorder %s76, %s79
      %p85 = scmp.eq.s32.totalorder %s24, 0
      %p86 = por %p84, %p85
      %p87 = scmp.ne.s32.totalorder %s76, %s79
      %p88 = scmp.eq.s32.totalorder %s29, 7
      %p89 = por %p87, %p88
      %p90 = scmp.ne.s32.totalorder %s79, %s80
      %p91 = scmp.eq.s32.totalorder %s29, 0
      %p92 = por %p90, %p91
      %p93 = scmp.ne.s32.totalorder %s79, %s80
      %p94 = scmp.eq.s32.totalorder %s30, 7
      %p95 = por %p93, %p94
      %p97 = scmp.ne.s32.totalorder %s80, %s96
      %p98 = scmp.eq.s32.totalorder %s30, 0
      %p99 = por %p97, %p98
      %s101 = sadd.s32 %s100, 1
      %p104 = scmp.eq.s32.totalorder %s24, 7
      %p105 = scmp.ne.s32.totalorder %s100, %s102
      %p106 = scmp.eq.s32.totalorder %s24, 0
      %p107 = por %p105, %p106
      %p108 = scmp.ne.s32.totalorder %s100, %s102
      %p109 = scmp.eq.s32.totalorder %s29, 7
      %p110 = por %p108, %p109
      %p111 = scmp.ne.s32.totalorder %s102, %s103
      %p112 = scmp.eq.s32.totalorder %s29, 0
      %p113 = por %p111, %p112
      %p114 = scmp.ne.s32.totalorder %s102, %s103
      %p115 = scmp.eq.s32.totalorder %s30, 7
      %p116 = por %p114, %p115
      %p118 = scmp.ne.s32.totalorder %s103, %s117
      %p119 = scmp.eq.s32.totalorder %s30, 0
      %p120 = por %p118, %p119
      %s122 = sadd.s32 %s121, 1
      %p125 = scmp.eq.s32.totalorder %s24, 7
      %p126 = scmp.ne.s32.totalorder %s121, %s123
      %p127 = scmp.eq.s32.totalorder %s24, 0
      %p128 = por %p126, %p127
      %p129 = scmp.ne.s32.totalorder %s121, %s123
      %p130 = scmp.eq.s32.totalorder %s29, 7
      %p131 = por %p129, %p130
      %p132 = scmp.ne.s32.totalorder %s123, %s124
      %p133 = scmp.eq.s32.totalorder %s29, 0
      %p134 = por %p132, %p133
      %p135 = scmp.ne.s32.totalorder %s123, %s124
      %p136 = scmp.eq.s32.totalorder %s30, 7
      %p137 = por %p135, %p136
      %p139 = scmp.ne.s32.totalorder %s124, %s138
      %p140 = scmp.eq.s32.totalorder %s30, 0
      %p141 = por %p139, %p140
      %s143 = sadd.s32 %s142, 1
      %p146 = scmp.eq.s32.totalorder %s24, 7
      %p147 = scmp.ne.s32.totalorder %s142, %s144
      %p148 = scmp.eq.s32.totalorder %s24, 0
      %p149 = por %p147, %p148
      %p150 = scmp.ne.s32.totalorder %s142, %s144
      %p151 = scmp.eq.s32.totalorder %s29, 7
      %p152 = por %p150, %p151
      %p153 = scmp.ne.s32.totalorder %s144, %s145
      %p154 = scmp.eq.s32.totalorder %s29, 0
      %p155 = por %p153, %p154
      %p156 = scmp.ne.s32.totalorder %s144, %s145
      %p157 = scmp.eq.s32.totalorder %s30, 7
      %p158 = por %p156, %p157
      %p160 = scmp.ne.s32.totalorder %s145, %s159
      %p161 = scmp.eq.s32.totalorder %s30, 0
      %p162 = por %p160, %p161
      %s164 = sadd.s32 %s163, 1
      %p167 = scmp.eq.s32.totalorder %s24, 7
      %p168 = scmp.ne.s32.totalorder %s163, %s165
      %p169 = scmp.eq.s32.totalorder %s24, 0
      %p170 = por %p168, %p169
      %p171 = scmp.ne.s32.totalorder %s163, %s165
      %p172 = scmp.eq.s32.totalorder %s29, 7
      %p173 = por %p171, %p172
      %p174 = scmp.ne.s32.totalorder %s165, %s166
      %p175 = scmp.eq.s32.totalorder %s29, 0
      %p176 = por %p174, %p175
      %p177 = scmp.ne.s32.totalorder %s165, %s166
      %p178 = scmp.eq.s32.totalorder %s30, 7
      %p179 = por %p177, %p178
      %p181 = scmp.ne.s32.totalorder %s166, %s180
      %p182 = scmp.eq.s32.totalorder %s30, 0
      %p183 = por %p181, %p182
      %s185 = sadd.s32 %s184, 1
      %p188 = scmp.eq.s32.totalorder %s24, 7
      %p189 = scmp.ne.s32.totalorder %s184, %s186
      %p190 = scmp.eq.s32.totalorder %s24, 0
      %p191 = por %p189, %p190
      %p192 = scmp.ne.s32.totalorder %s184, %s186
      %p193 = scmp.eq.s32.totalorder %s29, 7
      %p194 = por %p192, %p193
      %p195 = scmp.ne.s32.totalorder %s186, %s187
      %p196 = scmp.eq.s32.totalorder %s29, 0
      %p197 = por %p195, %p196
      %p198 = scmp.ne.s32.totalorder %s186, %s187
      %p199 = scmp.eq.s32.totalorder %s30, 7
      %p200 = por %p198, %p199
      %p202 = scmp.ne.s32.totalorder %s187, %s201
      %p203 = scmp.eq.s32.totalorder %s30, 0
      %p204 = por %p202, %p203
      %s206 = sadd.s32 %s205, 1
      %p209 = scmp.eq.s32.totalorder %s24, 7
      %p210 = scmp.ne.s32.totalorder %s205, %s207
      %p211 = scmp.eq.s32.totalorder %s24, 0
      %p212 = por %p210, %p211
      %p213 = scmp.ne.s32.totalorder %s205, %s207
      %p214 = scmp.eq.s32.totalorder %s29, 7
      %p215 = por %p213, %p214
      %p216 = scmp.ne.s32.totalorder %s207, %s208
      %p217 = scmp.eq.s32.totalorder %s29, 0
      %p218 = por %p216, %p217
      %p219 = scmp.ne.s32.totalorder %s207, %s208
      %p220 = scmp.eq.s32.totalorder %s30, 7
      %p221 = por %p219, %p220
      %p223 = scmp.ne.s32.totalorder %s208, %s222
      %p224 = scmp.eq.s32.totalorder %s30, 0
      %p225 = por %p223, %p224
      %s226 = ssub.s32 %s31, %s43
      %p227 = scmp.eq.s32.totalorder %s226, 0
      %s229 = sadd.s32 %s228, 1
      %s230 = scalar_select %p227, %s228, %s229
      %p233 = pneg %p227
      %p234 = scmp.eq.s32.totalorder %s24, 7
      %p235 = por %p233, %p234
      %p236 = scmp.ne.s32.totalorder %s228, %s231
      %p237 = scmp.eq.s32.totalorder %s24, 0
      %p238 = por %p236, %p237
      %p239 = scmp.ne.s32.totalorder %s228, %s231
      %p240 = scmp.eq.s32.totalorder %s29, 7
      %p241 = por %p239, %p240
      %p242 = scmp.ne.s32.totalorder %s231, %s232
      %p243 = scmp.eq.s32.totalorder %s29, 0
      %p244 = por %p242, %p243
      %p245 = scmp.ne.s32.totalorder %s231, %s232
      %p246 = scmp.eq.s32.totalorder %s30, 7
      %p247 = por %p245, %p246
      %p249 = scmp.ne.s32.totalorder %s232, %s248
      %p250 = scmp.eq.s32.totalorder %s30, 0
      %p251 = por %p249, %p250
      %p252 = scmp.le.s32.totalorder 1, %s24
      %p253 = scmp.lt.s32.totalorder %s24, 9
      %p254 = pnand %p252, %p253
      %p255 = pneg %p254
      // Predicated region
      $region9: #{tpu_custom_call.1} parent=5 // pred_check
        _
      $region10: #{tpu_custom_call.1} parent=5 // pred_check_branch
        %257 = sbr.rel (%p254) target = $region12
      $region11: #{tpu_custom_call.1} parent=5 // pred_region
        %s258 = ssub.s32 %s24, 1
        // Predicated region
        $region13: #{tpu_custom_call.1} parent=11 // pred_check
          %p259 = pneg %p113
        $region14: #{tpu_custom_call.1} parent=11 // pred_check_branch
          %261 = sbr.rel (%p259) target = $region16
        $region15: #{tpu_custom_call.1} parent=11 // pred_region
          %s263 = ssub.s32 2048, 2048
          %264 = vsyncadd [#allocation9], %s263
          %s265 = sshll.u32 [#allocation10], 4
          %s266 = int_to_ptr.vmem [resolvable:$true] %s265
          %271 = dma.hbm_to_vmem [thread:$0]  %s2, 2048, %s266, [#allocation9], 128, 128, 8
        $region16: #{tpu_custom_call.1} parent=11 // pred_fallthru
          _
        // Predicated region
        $region17: #{tpu_custom_call.1} parent=11 // pred_check
          %p272 = pneg %p134
        $region18: #{tpu_custom_call.1} parent=11 // pred_check_branch
          %274 = sbr.rel (%p272) target = $region20
        $region19: #{tpu_custom_call.1} parent=11 // pred_region
          _
        $region20: #{tpu_custom_call.1} parent=11 // pred_fallthru
          _
        // Predicated region
        $region21: #{tpu_custom_call.1} parent=11 // pred_check
          %p275 = pneg %p155
        $region22: #{tpu_custom_call.1} parent=11 // pred_check_branch
          %277 = sbr.rel (%p275) target = $region24
        $region23: #{tpu_custom_call.1} parent=11 // pred_region
          _
        $region24: #{tpu_custom_call.1} parent=11 // pred_fallthru
          _
        // Predicated region
        $region25: #{tpu_custom_call.1} parent=11 // pred_check
          %p278 = pneg %p176
        $region26: #{tpu_custom_call.1} parent=11 // pred_check_branch
          %280 = sbr.rel (%p278) target = $region28
        $region27: #{tpu_custom_call.1} parent=11 // pred_region
          %s282 = ssub.s32 2048, 2048
          %283 = vsyncadd [#allocation12], %s282
          %s284 = sshll.u32 [#allocation11], 4
          %s285 = int_to_ptr.vmem [resolvable:$true] %s284
          %290 = dma.hbm_to_vmem [thread:$0]  %s5, 2048, %s285, [#allocation12], 128, 128, 8
        $region28: #{tpu_custom_call.1} parent=11 // pred_fallthru
          _
        // Predicated region
        $region29: #{tpu_custom_call.1} parent=11 // pred_check
          %p291 = pneg %p197
        $region30: #{tpu_custom_call.1} parent=11 // pred_check_branch
          %293 = sbr.rel (%p291) target = $region32
        $region31: #{tpu_custom_call.1} parent=11 // pred_region
          _
        $region32: #{tpu_custom_call.1} parent=11 // pred_fallthru
          _
        // Predicated region
        $region33: #{tpu_custom_call.1} parent=11 // pred_check
          %p294 = pneg %p218
        $region34: #{tpu_custom_call.1} parent=11 // pred_check_branch
          %296 = sbr.rel (%p294) target = $region36
        $region35: #{tpu_custom_call.1} parent=11 // pred_region
          _
        $region36: #{tpu_custom_call.1} parent=11 // pred_fallthru
          _
      $region12: #{tpu_custom_call.1} parent=5 // pred_fallthru
        _
      %p297 = scmp.lt.s32.totalorder %s24, 8
      // Predicated region
      $region37: #{tpu_custom_call.1} parent=5 // pred_check
        %p298 = pneg %p297
      $region38: #{tpu_custom_call.1} parent=5 // pred_check_branch
        %300 = sbr.rel (%p298) target = $region40
      $region39: #{tpu_custom_call.1} parent=5 // pred_region
        // Predicated region
        $region41: #{tpu_custom_call.1} parent=39 // pred_check
          %p301 = pneg %p58
        $region42: #{tpu_custom_call.1} parent=39 // pred_check_branch
          %303 = sbr.rel (%p301) target = $region44
        $region43: #{tpu_custom_call.1} parent=39 // pred_region
          %s304 = sand.u32 %s48, 1
          %s305 = scalar_lea.sflag [#allocation6], %s304
          %s306 = sand.u32 %s48, 1
          %s307 = smul.addr %s306, 32
          %s308 = scalar_lea.vmem [#allocation5], %s307
          %s309 = smul.u32 4, %s32
          %s311 = ssub.s32 512, 512
          %312 = vsyncadd %s305, %s311
          %s313 = smul.addr %s31, 16
          %s314 = sadd.s32 %s309, %s313
          %s315 = smul.addr %s314, 128
          %s316 = scalar_lea.hbm %s0, %s315
          %s317 = sshll.u32 %s308, 4
          %s318 = int_to_ptr.vmem [resolvable:$true] %s317
          %323 = dma.hbm_to_vmem [thread:$0]  %s316, 512, %s318, %s305, 128, 128, 8
        $region44: #{tpu_custom_call.1} parent=39 // pred_fallthru
          _
        // Predicated region
        $region45: #{tpu_custom_call.1} parent=39 // pred_check
          %p324 = pneg %p86
        $region46: #{tpu_custom_call.1} parent=39 // pred_check_branch
          %326 = sbr.rel (%p324) target = $region48
        $region47: #{tpu_custom_call.1} parent=39 // pred_region
          %s327 = sand.u32 %s24, 1
          %s328 = scalar_lea.sflag [#allocation9], %s327
          %s329 = sand.u32 %s76, 1
          %s330 = smul.addr %s329, 4
          %s331 = scalar_lea.vmem [#allocation8], %s330
          %s333 = ssub.s32 64, 64
          %334 = vsyncadd %s328, %s333
          %s335 = smul.addr %s32, 2
          %s336 = sadd.s32 %s31, %s335
          %s337 = smul.addr %s336, 64
          %s338 = scalar_lea.hbm %s1, %s337
          %s340 = sshll.u32 %s331, 4
          %s341 = int_to_ptr.vmem [resolvable:$true] %s340
          %343 = dma.hbm_to_vmem [thread:$0]  %s338, 64, %s341, %s328
        $region48: #{tpu_custom_call.1} parent=39 // pred_fallthru
          _
      $region40: #{tpu_custom_call.1} parent=5 // pred_fallthru
        _
      %p344 = scmp.le.s32.totalorder 1, %s24
      %p345 = scmp.lt.s32.totalorder %s24, 9
      %p346 = pnand %p344, %p345
      %p347 = pneg %p346
      // Predicated region
      $region49: #{tpu_custom_call.1} parent=5 // pred_check
        _
      $region50: #{tpu_custom_call.1} parent=5 // pred_check_branch
        %349 = sbr.rel (%p346) target = $region52
      $region51: #{tpu_custom_call.1} parent=5 // pred_region
        %s350 = ssub.s32 %s24, 1
        %s351 = sand.u32 %s51, 1
        %s352 = scalar_lea.sflag [#allocation6], %s351
        %s353 = sand.u32 %s51, 1
        %s354 = smul.addr %s353, 32
        %s355 = scalar_lea.vmem [#allocation5], %s354
        // Predicated region
        $region53: #{tpu_custom_call.1} parent=51 // pred_check
          %p356 = pneg %p64
        $region54: #{tpu_custom_call.1} parent=51 // pred_check_branch
          %358 = sbr.rel (%p356) target = $region56
        $region55: #{tpu_custom_call.1} parent=51 // pred_region
          %359 = dma.done %s352, 512
        $region56: #{tpu_custom_call.1} parent=51 // pred_fallthru
          _
        %s360 = sand.u32 %s29, 1
        %s361 = scalar_lea.sflag [#allocation9], %s360
        %s362 = sand.u32 %s79, 1
        %s363 = smul.addr %s362, 4
        %s364 = scalar_lea.vmem [#allocation8], %s363
        // Predicated region
        $region57: #{tpu_custom_call.1} parent=51 // pred_check
          %p365 = pneg %p92
        $region58: #{tpu_custom_call.1} parent=51 // pred_check_branch
          %367 = sbr.rel (%p365) target = $region60
        $region59: #{tpu_custom_call.1} parent=51 // pred_region
          %368 = dma.done %s361, 64
        $region60: #{tpu_custom_call.1} parent=51 // pred_fallthru
          _
        // Predicated region
        $region61: #{tpu_custom_call.1} parent=51 // pred_check
          %p369 = pneg %p113
        $region62: #{tpu_custom_call.1} parent=51 // pred_check_branch
          %371 = sbr.rel (%p369) target = $region64
        $region63: #{tpu_custom_call.1} parent=51 // pred_region
          %372 = dma.done [#allocation9], 2048
        $region64: #{tpu_custom_call.1} parent=51 // pred_fallthru
          _
        // Predicated region
        $region65: #{tpu_custom_call.1} parent=51 // pred_check
          %p373 = pneg %p176
        $region66: #{tpu_custom_call.1} parent=51 // pred_check_branch
          %375 = sbr.rel (%p373) target = $region68
        $region67: #{tpu_custom_call.1} parent=51 // pred_region
          %376 = dma.done [#allocation12], 2048
        $region68: #{tpu_custom_call.1} parent=51 // pred_fallthru
          _
        %s377 = sand.u32 %s51, 1
        %s378 = scalar_lea.sflag [#allocation6], %s377
        %s379 = sand.u32 %s51, 1
        %s380 = smul.addr %s379, 32
        %s381 = scalar_lea.vmem [#allocation5], %s380
        %p382 = pneg %p64
        %p383 = pneg %p61
        %s384 = sand.u32 %s29, 1
        %s385 = scalar_lea.sflag [#allocation9], %s384
        %s386 = sand.u32 %s79, 1
        %s387 = smul.addr %s386, 4
        %s388 = scalar_lea.vmem [#allocation8], %s387
        %p389 = pneg %p92
        %p390 = pneg %p89
        %p391 = pneg %p113
        %p392 = pneg %p110
        %p393 = pneg %p134
        %p394 = pneg %p131
        %p395 = pneg %p155
        %p396 = pneg %p152
        %p397 = pneg %p176
        %p398 = pneg %p173
        %p399 = pneg %p197
        %p400 = pneg %p194
        %p401 = pneg %p218
        %p402 = pneg %p215
        %p403 = pneg %p244
        %p404 = pneg %p241
        %s405 = sand.u32 %s231, 1
        %s406 = scalar_lea.sflag [#allocation7], %s405
        %s407 = sand.u32 %s231, 1
        %s408 = scalar_lea.vmem [#allocation13], %s407
        %s409 = smul.u32 4, %s34
        %p410 = scmp.eq.s32.totalorder %s34, 0
        // Predicated region
        $region69: #{tpu_custom_call.1} parent=51 // pred_check
          %p411 = pneg %p410
        $region70: #{tpu_custom_call.1} parent=51 // pred_check_branch
          %413 = sbr.rel (%p411) target = $region72
        $region71: #{tpu_custom_call.1} parent=51 // pred_region
          %vm414 = vcmask 0
          %415 = vst.msk [vmem:[#allocation2] sm:$0x1] %vm414, -inf
          %416 = vst.msk [vmem:[#allocation3] sm:$0x1] %vm414, 0.0
          %417 = vst [vmem:[#allocation4] sm:$0x1] 0.0
        $region72: #{tpu_custom_call.1} parent=51 // pred_fallthru
          _
        %v418 = vld [vmem:[%s355] sm:$0xff]
        %v419 = vld [vmem:[%s355 + $0x8] sm:$0xff]
        %v420 = vld [vmem:[%s355 + $0x10] sm:$0xff]
        %v421 = vld [vmem:[%s355 + $0x18] sm:$0xff]
        %v422 = vld [vmem:[%s364] sm:$0xf]
        %v423 = vld [vmem:[#allocation10] sm:$0xff]
        %v424 = vld [vmem:[#allocation10 + $0x8] sm:$0xff]
        %v425 = vld [vmem:[#allocation10 + $0x10] sm:$0xff]
        %v426 = vld [vmem:[#allocation10 + $0x18] sm:$0xff]
        %v427 = vld [vmem:[#allocation10 + $0x20] sm:$0xff]
        %v428 = vld [vmem:[#allocation10 + $0x28] sm:$0xff]
        %v429 = vld [vmem:[#allocation10 + $0x30] sm:$0xff]
        %v430 = vld [vmem:[#allocation10 + $0x38] sm:$0xff]
        %v431 = vld [vmem:[#allocation10 + $0x40] sm:$0xff]
        %v432 = vld [vmem:[#allocation10 + $0x48] sm:$0xff]
        %v433 = vld [vmem:[#allocation10 + $0x50] sm:$0xff]
        %v434 = vld [vmem:[#allocation10 + $0x58] sm:$0xff]
        %v435 = vld [vmem:[#allocation10 + $0x60] sm:$0xff]
        %v436 = vld [vmem:[#allocation10 + $0x68] sm:$0xff]
        %v437 = vld [vmem:[#allocation10 + $0x70] sm:$0xff]
        %v438 = vld [vmem:[#allocation10 + $0x78] sm:$0xff]
        %v439 = vld [vmem:[%s3] sm:$0x1]
        %v441 = vlaneseq
        %v442 = vshrl.u32 %v441, 7
        %v443 = vsub.s32 0, %v442
        %v444 = vrot.slane %v439, %v443
        %446 = vmatprep.subr.mxu0 0.0
        %447 = vmatpush1.msra.mxu0 %v438
        %448 = vmatprep.subr.mxu0 0.0
        %449 = vmatpush1.msra.mxu0 %v437
        %450 = vmatprep.subr.mxu0 0.0
        %451 = vmatpush1.msra.mxu0 %v436
        %452 = vmatprep.subr.mxu0 0.0
        %453 = vmatpush1.msra.mxu0 %v435
        %454 = vmatprep.subr.mxu0 0.0
        %455 = vmatpush1.msra.mxu0 %v434
        %456 = vmatprep.subr.mxu0 0.0
        %457 = vmatpush1.msra.mxu0 %v433
        %458 = vmatprep.subr.mxu0 0.0
        %459 = vmatpush1.msra.mxu0 %v432
        %460 = vmatprep.subr.mxu0 0.0
        %461 = vmatpush1.msra.mxu0 %v431
        %462 = vmatprep.subr.mxu0 0.0
        %463 = vmatpush1.msra.mxu0 %v430
        %464 = vmatprep.subr.mxu0 0.0
        %465 = vmatpush1.msra.mxu0 %v429
        %466 = vmatprep.subr.mxu0 0.0
        %467 = vmatpush1.msra.mxu0 %v428
        %468 = vmatprep.subr.mxu0 0.0
        %469 = vmatpush1.msra.mxu0 %v427
        %470 = vmatprep.subr.mxu0 0.0
        %471 = vmatpush1.msra.mxu0 %v426
        %472 = vmatprep.subr.mxu0 0.0
        %473 = vmatpush1.msra.mxu0 %v425
        %474 = vmatprep.subr.mxu0 0.0
        %475 = vmatpush1.msra.mxu0 %v424
        %476 = vmatprep.subr.mxu0 0.0
        %477 = vmatpush1.msra.mxu0 %v423
        %478 = vmatprep.subr.mxu0 0.0
        %479 = vmatpush2.msra.mxu0 0.0
        %480 = vmatprep.subr.mxu0 0.0
        %481 = vmatpush2.msra.mxu0 0.0
        %482 = vmatprep.subr.mxu0 0.0
        %483 = vmatpush2.msra.mxu0 0.0
        %484 = vmatprep.subr.mxu0 0.0
        %485 = vmatpush2.msra.mxu0 0.0
        %486 = vmatprep.subr.mxu0 0.0
        %487 = vmatpush2.msra.mxu0 0.0
        %488 = vmatprep.subr.mxu0 0.0
        %489 = vmatpush2.msra.mxu0 0.0
        %490 = vmatprep.subr.mxu0 0.0
        %491 = vmatpush2.msra.mxu0 0.0
        %492 = vmatprep.subr.mxu0 0.0
        %493 = vmatpush2.msra.mxu0 0.0
        %494 = vmatprep.subr.mxu0 0.0
        %495 = vmatpush2.msra.mxu0 0.0
        %496 = vmatprep.subr.mxu0 0.0
        %497 = vmatpush2.msra.mxu0 0.0
        %498 = vmatprep.subr.mxu0 0.0
        %499 = vmatpush2.msra.mxu0 0.0
        %500 = vmatprep.subr.mxu0 0.0
        %501 = vmatpush2.msra.mxu0 0.0
        %502 = vmatprep.subr.mxu0 0.0
        %503 = vmatpush2.msra.mxu0 0.0
        %504 = vmatprep.subr.mxu0 0.0
        %505 = vmatpush2.msra.mxu0 0.0
        %506 = vmatprep.subr.mxu0 0.0
        %507 = vmatpush2.msra.mxu0 0.0
        %508 = vmatprep.subr.mxu0 0.0
        %509 = vmatpush2.msra.mxu0 0.0
        %510 = vmatprep.mubr.f32.mxu0 0.0
        %511 = vmatmul.mubr.f32.gmra.mxu0 %v418
        %v512 = vpop.f32.mrf.mxu0
        %v513 = vadd.f32 %v444, %v512
        %v514 = vpop.f32.mrf.mxu0
        %515 = vmatprep.mubr.f32.mxu0 0.0
        %516 = vmatmul.mubr.f32.gmra.mxu0 %v419
        %v517 = vpop.f32.mrf.mxu0
        %v518 = vadd.f32 %v444, %v517
        %v519 = vpop.f32.mrf.mxu0
        %520 = vmatprep.mubr.f32.mxu0 0.0
        %521 = vmatmul.mubr.f32.gmra.mxu0 %v420
        %v522 = vpop.f32.mrf.mxu0
        %v523 = vadd.f32 %v444, %v522
        %v524 = vpop.f32.mrf.mxu0
        %525 = vmatprep.mubr.f32.mxu0 0.0
        %526 = vmatmul.mubr.f32.gmra.mxu0 %v421
        %v527 = vpop.f32.mrf.mxu0
        %v528 = vadd.f32 %v444, %v527
        %v529 = vpop.f32.mrf.mxu0
        %530 = vdwg.mxu0
        %v531 = vtanh.pop %v513
        %v532 = vtanh.pop %v518
        %v533 = vtanh.pop %v523
        %v534 = vtanh.pop %v528
        %v535 = vld [vmem:[%s4] sm:$0x1]
        %v537 = vlaneseq
        %v538 = vshrl.u32 %v537, 7
        %v539 = vsub.s32 0, %v538
        %v540 = vrot.slane %v535, %v539
        %v542 = vmul.f32 %v531, %v540
        %v543 = vmul.f32 %v532, %v540
        %v544 = vmul.f32 %v533, %v540
        %v545 = vmul.f32 %v534, %v540
        %546 = vadd.xlane.f32.xlu0 %v542
        %v547 = vpop.xlane.xlu0 %546
        %548 = vadd.xlane.f32.xlu0 %v543
        %v549 = vpop.xlane.xlu0 %548
        %550 = vadd.xlane.f32.xlu0 %v544
        %v551 = vpop.xlane.xlu0 %550
        %552 = vadd.xlane.f32.xlu0 %v545
        %v553 = vpop.xlane.xlu0 %552
        %vm554 = vcmp.eq.f32.partialorder %v422, 0.0
        %v559 = vlaneseq
        %v560 = vand.u32 %v559, 127
        %v561 = vlaneseq
        %v562 = vshrl.u32 %v561, 7
        %v563 = vsub.s32 %v560, %v562
        %v564 = vrot.slane %v547, %v563
        %v565 = vlaneseq
        %v566 = vshrl.u32 %v565, 7
        %v567 = vsub.s32 %v560, %v566
        %v568 = vrot.slane %v549, %v567
        %v569 = vlaneseq
        %v570 = vshrl.u32 %v569, 7
        %v571 = vsub.s32 %v560, %v570
        %v572 = vrot.slane %v551, %v571
        %v573 = vlaneseq
        %v574 = vshrl.u32 %v573, 7
        %v575 = vsub.s32 %v560, %v574
        %v576 = vrot.slane %v553, %v575
        %vm577 = vcmask 1041409
        %v578 = vsel %vm577, %v568, %v564
        %vm579 = vcmask 1042434
        %v580 = vsel %vm579, %v572, %v578
        %vm581 = vcmask 1043459
        %v582 = vsel %vm581, %v576, %v580
        %v584 = vsel %vm554, -1e+09, %v582
        %vm585 = vcmask 60416
        %v586 = vsel %vm585, %v584, -inf
        %587 = vmax.xlane.f32.xlu0 %v586
        %v588 = vpop.xlane.xlu0 %587
        %v589 = vsub.f32 %v584, %v588
        %v590 = vmul.f32 %v589, 1.442695
        %v591 = vpow.pop %v590
        %v592 = vsel %vm585, %v591, 0.0
        %593 = vadd.xlane.f32.xlu0 %v592
        %v594 = vpop.xlane.xlu0 %593
        %v595 = vrcp.pop %v594
        %v596 = vmul.f32 %v591, %v595
        %v597 = vlaneseq
        %v598 = vshrl.u32 %v597, 7
        %v599 = vsub.s32 0, %v598
        %v600 = vrot.slane %v596, %v599
        %602 = vbcast.lane.b32.xlu0 %v600, 256
        %v603 = vpop.permute.xlu0 %602
        %v604 = vlaneseq
        %v605 = vshrl.u32 %v604, 7
        %v606 = vsub.s32 1, %v605
        %v607 = vrot.slane %v596, %v606
        %609 = vbcast.lane.b32.xlu0 %v607, 256
        %v610 = vpop.permute.xlu0 %609
        %v611 = vlaneseq
        %v612 = vshrl.u32 %v611, 7
        %v613 = vsub.s32 2, %v612
        %v614 = vrot.slane %v596, %v613
        %616 = vbcast.lane.b32.xlu0 %v614, 256
        %v617 = vpop.permute.xlu0 %616
        %v618 = vlaneseq
        %v619 = vshrl.u32 %v618, 7
        %v620 = vsub.s32 3, %v619
        %v621 = vrot.slane %v596, %v620
        %623 = vbcast.lane.b32.xlu0 %v621, 256
        %v624 = vpop.permute.xlu0 %623
        %v625 = vmul.f32 %v603, %v418
        %v626 = vmul.f32 %v610, %v419
        %v627 = vmul.f32 %v617, %v420
        %v628 = vmul.f32 %v624, %v421
        %v629 = vrot.slane %v625, 4
        %v630 = vadd.f32 %v625, %v629
        %v631 = vrot.slane %v630, 2
        %v632 = vadd.f32 %v630, %v631
        %v633 = vrot.slane %v632, 1
        %v634 = vadd.f32 %v632, %v633
        %v635 = vrot.slane %v626, 4
        %v636 = vadd.f32 %v626, %v635
        %v637 = vrot.slane %v636, 2
        %v638 = vadd.f32 %v636, %v637
        %v639 = vrot.slane %v638, 1
        %v640 = vadd.f32 %v638, %v639
        %v641 = vrot.slane %v627, 4
        %v642 = vadd.f32 %v627, %v641
        %v643 = vrot.slane %v642, 2
        %v644 = vadd.f32 %v642, %v643
        %v645 = vrot.slane %v644, 1
        %v646 = vadd.f32 %v644, %v645
        %v647 = vrot.slane %v628, 4
        %v648 = vadd.f32 %v628, %v647
        %v649 = vrot.slane %v648, 2
        %v650 = vadd.f32 %v648, %v649
        %v651 = vrot.slane %v650, 1
        %v652 = vadd.f32 %v650, %v651
        %v653 = vld [vmem:[#allocation11] sm:$0xff]
        %v654 = vld [vmem:[#allocation11 + $0x8] sm:$0xff]
        %v655 = vld [vmem:[#allocation11 + $0x10] sm:$0xff]
        %v656 = vld [vmem:[#allocation11 + $0x18] sm:$0xff]
        %v657 = vld [vmem:[#allocation11 + $0x20] sm:$0xff]
        %v658 = vld [vmem:[#allocation11 + $0x28] sm:$0xff]
        %v659 = vld [vmem:[#allocation11 + $0x30] sm:$0xff]
        %v660 = vld [vmem:[#allocation11 + $0x38] sm:$0xff]
        %v661 = vld [vmem:[#allocation11 + $0x40] sm:$0xff]
        %v662 = vld [vmem:[#allocation11 + $0x48] sm:$0xff]
        %v663 = vld [vmem:[#allocation11 + $0x50] sm:$0xff]
        %v664 = vld [vmem:[#allocation11 + $0x58] sm:$0xff]
        %v665 = vld [vmem:[#allocation11 + $0x60] sm:$0xff]
        %v666 = vld [vmem:[#allocation11 + $0x68] sm:$0xff]
        %v667 = vld [vmem:[#allocation11 + $0x70] sm:$0xff]
        %v668 = vld [vmem:[#allocation11 + $0x78] sm:$0xff]
        %v669 = vld [vmem:[%s6] sm:$0x1]
        %v671 = vlaneseq
        %v672 = vshrl.u32 %v671, 7
        %v673 = vsub.s32 0, %v672
        %v674 = vrot.slane %v669, %v673
        %v680 = vsel %vm577, %v640, %v634
        %v681 = vsel %vm579, %v646, %v680
        %v682 = vsel %vm581, %v652, %v681
        %684 = vmatprep.subr.mxu0 0.0
        %685 = vmatpush1.msra.mxu0 %v668
        %686 = vmatprep.subr.mxu0 0.0
        %687 = vmatpush1.msra.mxu0 %v667
        %688 = vmatprep.subr.mxu0 0.0
        %689 = vmatpush1.msra.mxu0 %v666
        %690 = vmatprep.subr.mxu0 0.0
        %691 = vmatpush1.msra.mxu0 %v665
        %692 = vmatprep.subr.mxu0 0.0
        %693 = vmatpush1.msra.mxu0 %v664
        %694 = vmatprep.subr.mxu0 0.0
        %695 = vmatpush1.msra.mxu0 %v663
        %696 = vmatprep.subr.mxu0 0.0
        %697 = vmatpush1.msra.mxu0 %v662
        %698 = vmatprep.subr.mxu0 0.0
        %699 = vmatpush1.msra.mxu0 %v661
        %700 = vmatprep.subr.mxu0 0.0
        %701 = vmatpush1.msra.mxu0 %v660
        %702 = vmatprep.subr.mxu0 0.0
        %703 = vmatpush1.msra.mxu0 %v659
        %704 = vmatprep.subr.mxu0 0.0
        %705 = vmatpush1.msra.mxu0 %v658
        %706 = vmatprep.subr.mxu0 0.0
        %707 = vmatpush1.msra.mxu0 %v657
        %708 = vmatprep.subr.mxu0 0.0
        %709 = vmatpush1.msra.mxu0 %v656
        %710 = vmatprep.subr.mxu0 0.0
        %711 = vmatpush1.msra.mxu0 %v655
        %712 = vmatprep.subr.mxu0 0.0
        %713 = vmatpush1.msra.mxu0 %v654
        %714 = vmatprep.subr.mxu0 0.0
        %715 = vmatpush1.msra.mxu0 %v653
        %716 = vmatprep.subr.mxu0 0.0
        %717 = vmatpush2.msra.mxu0 0.0
        %718 = vmatprep.subr.mxu0 0.0
        %719 = vmatpush2.msra.mxu0 0.0
        %720 = vmatprep.subr.mxu0 0.0
        %721 = vmatpush2.msra.mxu0 0.0
        %722 = vmatprep.subr.mxu0 0.0
        %723 = vmatpush2.msra.mxu0 0.0
        %724 = vmatprep.subr.mxu0 0.0
        %725 = vmatpush2.msra.mxu0 0.0
        %726 = vmatprep.subr.mxu0 0.0
        %727 = vmatpush2.msra.mxu0 0.0
        %728 = vmatprep.subr.mxu0 0.0
        %729 = vmatpush2.msra.mxu0 0.0
        %730 = vmatprep.subr.mxu0 0.0
        %731 = vmatpush2.msra.mxu0 0.0
        %732 = vmatprep.subr.mxu0 0.0
        %733 = vmatpush2.msra.mxu0 0.0
        %734 = vmatprep.subr.mxu0 0.0
        %735 = vmatpush2.msra.mxu0 0.0
        %736 = vmatprep.subr.mxu0 0.0
        %737 = vmatpush2.msra.mxu0 0.0
        %738 = vmatprep.subr.mxu0 0.0
        %739 = vmatpush2.msra.mxu0 0.0
        %740 = vmatprep.subr.mxu0 0.0
        %741 = vmatpush2.msra.mxu0 0.0
        %742 = vmatprep.subr.mxu0 0.0
        %743 = vmatpush2.msra.mxu0 0.0
        %744 = vmatprep.subr.mxu0 0.0
        %745 = vmatpush2.msra.mxu0 0.0
        %746 = vmatprep.subr.mxu0 0.0
        %747 = vmatpush2.msra.mxu0 0.0
        %748 = vmatprep.mubr.f32.mxu0 0.0
        %749 = vmatmul.mubr.f32.gmra.mxu0 %v682
        %v750 = vpop.f32.mrf.mxu0
        %v751 = vadd.f32 %v674, %v750
        %v752 = vpop.f32.mrf.mxu0
        %753 = vdwg.mxu0
        %v754 = vtanh.pop %v751
        %v755 = vld [vmem:[%s7] sm:$0x1]
        %v757 = vlaneseq
        %v758 = vshrl.u32 %v757, 7
        %v759 = vsub.s32 0, %v758
        %v760 = vrot.slane %v755, %v759
        %v762 = vmul.f32 %v754, %v760
        %vm763 = vcmask 1043456
        %v764 = vsel %vm763, %v762, 0.0
        %765 = vadd.xlane.f32.xlu0 %v764
        %v766 = vpop.xlane.xlu0 %765
        %s767 = smul.u32 %s34, 4
        %v768 = vstv %s767
        %v769 = vadd.s32 %v768, %v560
        %vm770 = vcmp.lt.s32.totalorder %v769, 16
        %v772 = vlaneseq
        %v773 = vshrl.u32 %v772, 7
        %v774 = vsub.s32 %v560, %v773
        %v775 = vrot.slane %v766, %v774
        %v777 = vsel %vm770, %v775, -1e+09
        %v778 = vld [vmem:[#allocation2] sm:$0x1]
        %vm779 = vcmask 24576
        %v780 = vsel %vm779, %v777, -inf
        %781 = vmax.xlane.f32.xlu0 %v780
        %v782 = vpop.xlane.xlu0 %781
        %v783 = vmax.f32 %v778, %v782
        %v784 = vsub.f32 %v778, %v783
        %v785 = vmul.f32 %v784, 1.442695
        %v786 = vpow.pop %v785
        %788 = vset.pattern.permute.xlu0 0
        %789 = vperm.xlu0 %788, %v783
        %v790 = vpop.permute.xlu0 %789
        %v792 = vlaneseq
        %v793 = vshrl.u32 %v792, 7
        %v794 = vsub.s32 0, %v793
        %v795 = vrot.slane %v790, %v794
        %v796 = vsub.f32 %v777, %v795
        %v797 = vmul.f32 %v796, 1.442695
        %v798 = vpow.pop %v797
        %v799 = vld [vmem:[#allocation3] sm:$0x1]
        %v800 = vmul.f32 %v786, %v799
        %v801 = vsel %vm779, %v798, 0.0
        %802 = vadd.xlane.f32.xlu0 %v801
        %v803 = vpop.xlane.xlu0 %802
        %v804 = vadd.f32 %v800, %v803
        %vm805 = vcmask 0
        %806 = vst.msk [vmem:[#allocation3] sm:$0x1] %vm805, %v804
        %v807 = vlaneseq
        %v808 = vshrl.u32 %v807, 7
        %v809 = vsub.s32 0, %v808
        %v810 = vrot.slane %v798, %v809
        %812 = vbcast.lane.b32.xlu0 %v810, 256
        %v813 = vpop.permute.xlu0 %812
        %v814 = vmul.f32 %v813, %v682
        %v815 = vsel %vm763, %v814, 0.0
        %v816 = vrot.slane %v815, 4
        %v817 = vadd.f32 %v815, %v816
        %v818 = vrot.slane %v817, 2
        %v819 = vadd.f32 %v817, %v818
        %v820 = vrot.slane %v819, 1
        %v821 = vadd.f32 %v819, %v820
        %v822 = vld [vmem:[#allocation4] sm:$0x1]
        %824 = vset.pattern.permute.xlu0 0
        %825 = vperm.xlu0 %824, %v786
        %v826 = vpop.permute.xlu0 %825
        %v828 = vlaneseq
        %v829 = vshrl.u32 %v828, 7
        %v830 = vsub.s32 0, %v829
        %v831 = vrot.slane %v826, %v830
        %v832 = vmul.f32 %v831, %v822
        %v833 = vadd.f32 %v832, %v821
        %834 = vst [vmem:[#allocation4] sm:$0x1] %v833
        %835 = vst.msk [vmem:[#allocation2] sm:$0x1] %vm805, %v783
        %p836 = scmp.eq.s32.totalorder %s34, 3
        // Predicated region
        $region73: #{tpu_custom_call.1} parent=51 // pred_check
          %p837 = pneg %p836
        $region74: #{tpu_custom_call.1} parent=51 // pred_check_branch
          %839 = sbr.rel (%p837) target = $region76
        $region75: #{tpu_custom_call.1} parent=51 // pred_region
          %v840 = vld [vmem:[#allocation4] sm:$0x1]
          %v841 = vld [vmem:[#allocation3] sm:$0x1]
          %843 = vset.pattern.permute.xlu0 0
          %844 = vperm.xlu0 %843, %v841
          %v845 = vpop.permute.xlu0 %844
          %v847 = vlaneseq
          %v848 = vshrl.u32 %v847, 7
          %v849 = vsub.s32 0, %v848
          %v850 = vrot.slane %v845, %v849
          %v851 = vrcp.pop %v850
          %v852 = vmul.f32 %v840, %v851
          %853 = vst [vmem:[%s408] sm:$0x1] %v852
        $region76: #{tpu_custom_call.1} parent=51 // pred_fallthru
          _
        %s854 = sand.u32 %s231, 1
        %s855 = scalar_lea.sflag [#allocation7], %s854
        %s856 = sand.u32 %s231, 1
        %s857 = scalar_lea.vmem [#allocation13], %s856
        // Predicated region
        $region77: #{tpu_custom_call.1} parent=51 // pred_check
          %p858 = pneg %p241
        $region78: #{tpu_custom_call.1} parent=51 // pred_check_branch
          %860 = sbr.rel (%p858) target = $region80
        $region79: #{tpu_custom_call.1} parent=51 // pred_region
          %s862 = ssub.s32 16, 16
          %863 = vsyncadd %s855, %s862
          %s864 = smul.addr %s33, 16
          %s865 = scalar_lea.hbm %s8, %s864
          %s867 = sshll.u32 %s857, 4
          %s868 = int_to_ptr.vmem [resolvable:$true] %s867
          %870 = dma.vmem_to_hbm [thread:$0]  %s868, 16, %s865, %s855
        $region80: #{tpu_custom_call.1} parent=51 // pred_fallthru
          _
      $region52: #{tpu_custom_call.1} parent=5 // pred_fallthru
        _
      %p871 = scmp.le.s32.totalorder 2, %s24
      // Predicated region
      $region81: #{tpu_custom_call.1} parent=5 // pred_check
        %p872 = pneg %p871
      $region82: #{tpu_custom_call.1} parent=5 // pred_check_branch
        %874 = sbr.rel (%p872) target = $region84
      $region83: #{tpu_custom_call.1} parent=5 // pred_region
        %s875 = ssub.s32 %s24, 2
        // Predicated region
        $region85: #{tpu_custom_call.1} parent=83 // pred_check
          %p876 = pneg %p247
        $region86: #{tpu_custom_call.1} parent=83 // pred_check_branch
          %878 = sbr.rel (%p876) target = $region88
        $region87: #{tpu_custom_call.1} parent=83 // pred_region
          %s879 = sand.u32 %s232, 1
          %s880 = scalar_lea.sflag [#allocation7], %s879
          %s881 = sand.u32 %s232, 1
          %s882 = scalar_lea.vmem [#allocation13], %s881
          %883 = dma.done %s880, 16
        $region88: #{tpu_custom_call.1} parent=83 // pred_fallthru
          _
      $region84: #{tpu_custom_call.1} parent=5 // pred_fallthru
        _
    $region6: #{tpu_custom_call.1} parent=1 // loop_footer
      %s28 = sadd.s32 1, %s24
    $region7: #{tpu_custom_call.1} parent=1 // loop_footer_branch
      %23 = sbr.rel target = $region3
    $region8: #{tpu_custom_call.1} parent=1 // loop_exit
      _
    %884 = vsyncpa [#allocation6], 1
    %s885 = scalar_lea.sflag [#allocation6], 1
    %886 = vsyncpa %s885, 1
    %887 = vsyncpa [#allocation9], 1
    %s888 = scalar_lea.sflag [#allocation9], 1
    %889 = vsyncpa %s888, 1
    %890 = vsyncpa [#allocation12], 1
    %891 = vsyncpa [#allocation7], 1
    %s892 = scalar_lea.sflag [#allocation7], 1
    %893 = vsyncpa %s892, 1

</llo_original>
